<compile_context>
chip_gen: v7x
topology: tpu7x:2x2x1
jax: 0.10.0
libtpu: 0.0.40
codegen_flags: <defaults>
</compile_context>

<pallas_src>
import functools
import math

import jax
import jax.numpy as jnp
from jax import lax
from jax.experimental import pallas as pl
from jax.experimental.pallas import tpu as pltpu


def _round_up(x, m):
    return ((x + m - 1) // m) * m


def _pick_block(t_pad, want):
    """Largest multiple of 128 that divides t_pad and is <= max(128, want)."""
    want = max(128, min(want, t_pad))
    best = 128
    k = 128
    while k <= want:
        if t_pad % k == 0:
            best = k
        k += 128
    return best


def _vmem_limit_bytes():
    try:
        cap = int(pltpu.get_tpu_info().vmem_capacity_bytes)
    except Exception:
        cap = 64 << 20  # conservative fallback (v7x-class per-core VMEM)
    # Leave ~25% headroom; never request more than 96 MiB.  On a 64 MiB/core
    # part (v7x) this clamps to 48 MiB, on 128 MiB parts (v5e/v6e) to 96 MiB.
    return int(min((cap * 3) // 4, 96 << 20))


def _vmem_step_bytes(cp, tq, kv, in_dsize, c_dsize):
    """Rough per-grid-step VMEM footprint used to shrink the tile sizes."""
    blocks = 2 * in_dsize * (2 * cp * tq + 2 * cp * kv)    # dbl-buffered q,o,k,v
    scratch = 4 * (cp * tq + 2 * tq) + c_dsize * cp * tq   # acc + m + l + q_scaled
    temps = (8 + c_dsize) * kv * tq + 4 * cp * tq          # s(f32), p(f32+cast), pv
    return blocks + scratch + temps


def _attn_kernel(q_ref, k_ref, v_ref, o_ref, m_sc, l_sc, acc_sc, qs_sc, *,
                 scale, kv_blk, t_valid, need_mask, compute_dtype):
    """One grid step: one head x one query tile x one KV tile, online softmax."""
    kv = pl.program_id(2)
    n_kv = pl.num_programs(2)

    @pl.when(kv == 0)
    def _init():
        m_sc[...] = jnp.full(m_sc.shape, -jnp.inf, dtype=m_sc.dtype)
        l_sc[...] = jnp.zeros(l_sc.shape, dtype=l_sc.dtype)
        acc_sc[...] = jnp.zeros(acc_sc.shape, dtype=acc_sc.dtype)
        # q is resident across the KV axis: fold the softmax scale in exactly
        # once per (batch-head, query-tile) and cast for the MXU.
        qs_sc[...] = (q_ref[...].astype(jnp.float32) * scale).astype(compute_dtype)

    def _step(masked):
        q = qs_sc[...]                                    # (Cp, TQ)
        k = k_ref[...].astype(compute_dtype)              # (Cp, KV)
        v = v_ref[...].astype(compute_dtype)              # (Cp, KV)

        # s[s, t] = sum_c k[c, s] * q[c, t]  -> (KV, TQ), f32 acc on the MXU.
        s = lax.dot_general(k, q, (((0,), (0,)), ((), ())),
                            preferred_element_type=jnp.float32)
        if masked:
            row = kv * kv_blk + lax.broadcasted_iota(jnp.int32, s.shape, 0)
            s = jnp.where(row < t_valid, s, jnp.float32(-1e30))

        m_prev = m_sc[...]                                # (1, TQ)
        m_new = jnp.maximum(m_prev, jnp.max(s, axis=0, keepdims=True))
        alpha = jnp.exp(m_prev - m_new)                   # (1, TQ)
        p = jnp.exp(s - m_new)                            # (KV, TQ), f32
        l_sc[...] = alpha * l_sc[...] + jnp.sum(p, axis=0, keepdims=True)
        # acc[c, t] += sum_s v[c, s] * p[s, t]  -> (Cp, TQ): accumulator and
        # output stay lane-dense along T; no finalize transpose needed.
        pv = lax.dot_general(v, p.astype(compute_dtype), (((1,), (0,)), ((), ())),
                             preferred_element_type=jnp.float32)
        acc_sc[...] = alpha * acc_sc[...] + pv
        m_sc[...] = m_new

    if need_mask:
        # Only the last KV tile can contain padded keys (Tp - T < 128 <= KV),
        # so keep the masking ops out of the steady-state loop.
        @pl.when(kv < n_kv - 1)
        def _steady():
            _step(False)

        @pl.when(kv == n_kv - 1)
        def _last():
            _step(True)
    else:
        _step(False)

    @pl.when(kv == n_kv - 1)
    def _finalize():
        inv_l = pl.reciprocal(l_sc[...], approx=False)    # exact; runs once
        o_ref[...] = (acc_sc[...] * inv_l).astype(o_ref.dtype)


def qkv_attention_legacy(qkv, n_heads, *, q_blk=None, kv_blk=None,
                         use_bf16_mxu=True):
    """qkv: [N, H*3*C, T] -> [N, H*C, T] (matches QKVAttentionLegacy.forward)."""
    N, width, T = qkv.shape
    assert width % (3 * n_heads) == 0
    C = width // (3 * n_heads)
    B = N * n_heads
    scale = 1.0 / math.sqrt(C)               # == (C**-0.25)**2 folded into q once

    in_dtype = jnp.dtype(qkv.dtype)
    in_dsize = in_dtype.itemsize
    if use_bf16_mxu and in_dtype in (jnp.dtype(jnp.float32), jnp.dtype(jnp.bfloat16)):
        compute_dtype = jnp.bfloat16
    else:
        compute_dtype = qkv.dtype
    c_dsize = jnp.dtype(compute_dtype).itemsize

    sub = max({4: 8, 2: 16, 1: 32}.get(in_dsize, 8),
              {4: 8, 2: 16, 1: 32}.get(c_dsize, 8))
    Cp = _round_up(C, sub)                    # sublane-aligned channels
    Tp = _round_up(T, 128)                    # lane-dense sequence

    # Single reshape(+pad); q/k/v are never materialized as separate HBM copies.
    x = qkv.reshape(B, 3, C, T)
    if Cp != C or Tp != T:
        x = jnp.pad(x, ((0, 0), (0, 0), (0, Cp - C), (0, Tp - T)))
    x = x.reshape(B, 3 * Cp, Tp)

    # Tile selection: query tiles cap VMEM independent of T; shrink KV, then
    # TQ, until the per-step footprint fits a clamped per-core VMEM budget.
    vmem_limit = _vmem_limit_bytes()
    small_vmem = vmem_limit <= (48 << 20)     # v7x-class (64 MiB/core) parts
    TQ = _pick_block(Tp, q_blk if q_blk else (256 if small_vmem else 512))
    KV = _pick_block(Tp, kv_blk if kv_blk else (512 if small_vmem else 1024))
    budget = vmem_limit // 2
    while _vmem_step_bytes(Cp, TQ, KV, in_dsize, c_dsize) > budget and (
            TQ > 128 or KV > 128):
        if KV >= TQ and KV > 128:
            KV = _pick_block(Tp, KV // 2)
        else:
            TQ = _pick_block(Tp, TQ // 2)
    n_qt, n_kv = Tp // TQ, Tp // KV

    q_spec = pl.BlockSpec((None, Cp, TQ), lambda b, t, s: (b, 0, t))
    k_spec = pl.BlockSpec((None, Cp, KV), lambda b, t, s: (b, 1, s))
    v_spec = pl.BlockSpec((None, Cp, KV), lambda b, t, s: (b, 2, s))
    o_spec = pl.BlockSpec((None, Cp, TQ), lambda b, t, s: (b, 0, t))

    kernel = functools.partial(
        _attn_kernel, scale=scale, kv_blk=KV, t_valid=T,
        need_mask=(Tp != T), compute_dtype=compute_dtype)

    cost = pl.CostEstimate(
        flops=4 * B * Tp * Tp * Cp,
        transcendentals=B * Tp * Tp,
        bytes_accessed=in_dsize * B * Cp * Tp * (2 + 2 * n_qt))

    out = pl.pallas_call(
        kernel,
        out_shape=jax.ShapeDtypeStruct((B, Cp, Tp), qkv.dtype),
        grid_spec=pltpu.PrefetchScalarGridSpec(
            num_scalar_prefetch=0,
            grid=(B, n_qt, n_kv),
            in_specs=[q_spec, k_spec, v_spec],
            out_specs=o_spec,
            scratch_shapes=[
                pltpu.VMEM((1, TQ), jnp.float32),         # running max
                pltpu.VMEM((1, TQ), jnp.float32),         # running denom
                pltpu.VMEM((Cp, TQ), jnp.float32),        # running numerator
                pltpu.VMEM((Cp, TQ), compute_dtype),      # scaled / cast q
            ]),
        compiler_params=pltpu.CompilerParams(
            dimension_semantics=("parallel", "parallel", "arbitrary"),
            vmem_limit_bytes=vmem_limit),
        cost_estimate=cost,
    )(x, x, x)

    out = out[:, :C, :T]
    return out.reshape(N, n_heads * C, T)


def _reference(qkv, n_heads):
    # Pure-JAX reference mirroring the PyTorch code exactly.
    N, width, T = qkv.shape
    C = width // (3 * n_heads)
    B = N * n_heads
    qkv_r = qkv.reshape(B, 3 * C, T)
    q, k, v = qkv_r[:, :C], qkv_r[:, C:2 * C], qkv_r[:, 2 * C:]
    scale = 1.0 / math.sqrt(math.sqrt(C))
    w = jnp.einsum('bct,bcs->bts', q * scale, k * scale)
    w = jax.nn.softmax(w.astype(jnp.float32), axis=-1).astype(w.dtype)
    a = jnp.einsum('bts,bcs->bct', w, v)
    return a.reshape(N, -1, T)


if __name__ == "__main__":
    key = jax.random.PRNGKey(0)
    k1, k2, k3 = jax.random.split(key, 3)

    # Case 1: small f32 case with the default bf16 MXU compute path; exercises
    # channel padding (C=8 -> Cp=16) and key-padding masking (T=16 -> Tp=128).
    n_heads = 4
    N, C, T = 2, 8, 16                        # width = H * 3 * C = 96
    qkv = jax.random.normal(k1, (N, n_heads * 3 * C, T), dtype=jnp.float32)
    out = jax.block_until_ready(qkv_attention_legacy(qkv, n_heads))
    ref = _reference(qkv, n_heads)
    assert out.shape == (N, n_heads * C, T)
    assert jnp.allclose(out, ref, atol=3e-2, rtol=3e-2), "case 1 mismatch"

    # Case 2: unaligned C and T, full-f32 MXU path, 2x2 (query, kv) tiling ->
    # exercises query tiling, online-softmax accumulation across KV steps and
    # the last-tile-only key mask.
    n_heads2, N2, C2, T2 = 2, 1, 12, 200      # width = 72
    qkv2 = jax.random.normal(k2, (N2, n_heads2 * 3 * C2, T2), dtype=jnp.float32)
    out2 = jax.block_until_ready(
        qkv_attention_legacy(qkv2, n_heads2, q_blk=128, kv_blk=128,
                             use_bf16_mxu=False))
    ref2 = _reference(qkv2, n_heads2)
    assert out2.shape == (N2, n_heads2 * C2, T2)
    assert jnp.allclose(out2, ref2, atol=5e-3, rtol=5e-3), "case 2 mismatch"

    # Case 3: native bf16 input, aligned shapes (Cp=64, Tp=256), single tile.
    n_heads3, N3, C3, T3 = 2, 1, 64, 256      # width = 384
    qkv3 = jax.random.normal(k3, (N3, n_heads3 * 3 * C3, T3), dtype=jnp.bfloat16)
    out3 = jax.block_until_ready(qkv_attention_legacy(qkv3, n_heads3))
    ref3 = _reference(qkv3, n_heads3)
    assert out3.shape == (N3, n_heads3 * C3, T3)
    assert jnp.allclose(out3.astype(jnp.float32), ref3.astype(jnp.float32),
                        atol=5e-2, rtol=5e-2), "case 3 mismatch"

    print("KERNEL_OK")
</pallas_src>

<mosaic_0001>
module attributes {stable_mosaic.version = 11 : i64} {
  func.func @_attn_kernel(%arg0: i32, %arg1: i32, %arg2: i32, %arg3: memref<1x16x128xf32, #tpu.memory_space<vmem>>, %arg4: memref<1x16x128xf32, #tpu.memory_space<vmem>>, %arg5: memref<1x16x128xf32, #tpu.memory_space<vmem>>, %arg6: memref<1x16x128xf32, #tpu.memory_space<vmem>>, %arg7: memref<1x128xf32, #tpu.memory_space<vmem>>, %arg8: memref<1x128xf32, #tpu.memory_space<vmem>>, %arg9: memref<16x128xf32, #tpu.memory_space<vmem>>, %arg10: memref<16x128xbf16, #tpu.memory_space<vmem>>) attributes {dimension_semantics = [#tpu.dimension_semantics<parallel>, #tpu.dimension_semantics<parallel>, #tpu.dimension_semantics<arbitrary>], iteration_bounds = array<i64: 8, 1, 1>, scalar_prefetch = 0 : i64, scratch_operands = 4 : i64, tpu.core_type = #tpu.core_type<tc>, window_params = [{transform_indices = @transform_0, window_bounds = array<i64: 1, 16, 128>}, {transform_indices = @transform_1, window_bounds = array<i64: 1, 16, 128>}, {transform_indices = @transform_2, window_bounds = array<i64: 1, 16, 128>}, {transform_indices = @transform_3, window_bounds = array<i64: 1, 16, 128>}]} {
    %c0_i32 = arith.constant 0 : i32
    %0 = arith.cmpi eq, %arg2, %c0_i32 : i32
    %1 = arith.extui %0 : i1 to i32
    %c0_i32_0 = arith.constant 0 : i32
    %2 = arith.cmpi ne, %1, %c0_i32_0 : i32
    scf.if %2 {
      %cst = arith.constant 0xFF800000 : f32
      %12 = vector.broadcast %cst : f32 to vector<1x128xf32>
      %c0 = arith.constant 0 : index
      %c0_7 = arith.constant 0 : index
      %13 = vector.load %arg7[%c0, %c0_7] : memref<1x128xf32, #tpu.memory_space<vmem>>, vector<1x128xf32>
      tpu.vector_store %arg7[%c0, %c0_7], %12 {strides = array<i32>} : memref<1x128xf32, #tpu.memory_space<vmem>>, vector<1x128xf32>,
      %cst_8 = arith.constant 0.000000e+00 : f32
      %14 = vector.broadcast %cst_8 : f32 to vector<1x128xf32>
      %c0_9 = arith.constant 0 : index
      %c0_10 = arith.constant 0 : index
      %15 = vector.load %arg8[%c0_9, %c0_10] : memref<1x128xf32, #tpu.memory_space<vmem>>, vector<1x128xf32>
      tpu.vector_store %arg8[%c0_9, %c0_10], %14 {strides = array<i32>} : memref<1x128xf32, #tpu.memory_space<vmem>>, vector<1x128xf32>,
      %cst_11 = arith.constant 0.000000e+00 : f32
      %16 = vector.broadcast %cst_11 : f32 to vector<16x128xf32>
      %c0_12 = arith.constant 0 : index
      %c0_13 = arith.constant 0 : index
      %17 = vector.load %arg9[%c0_12, %c0_13] : memref<16x128xf32, #tpu.memory_space<vmem>>, vector<16x128xf32>
      tpu.vector_store %arg9[%c0_12, %c0_13], %16 {strides = array<i32>} : memref<16x128xf32, #tpu.memory_space<vmem>>, vector<16x128xf32>,
      %c0_14 = arith.constant 0 : index
      %c0_15 = arith.constant 0 : index
      %c0_16 = arith.constant 0 : index
      %18 = vector.load %arg3[%c0_14, %c0_15, %c0_16] : memref<1x16x128xf32, #tpu.memory_space<vmem>>, vector<1x16x128xf32>
      %19 = vector.shape_cast %18 : vector<1x16x128xf32> to vector<16x128xf32>
      %cst_17 = arith.constant 0.353553385 : f32
      %20 = vector.broadcast %cst_17 : f32 to vector<16x128xf32>
      %21 = arith.mulf %19, %20 : vector<16x128xf32>
      %22 = arith.truncf %21 : vector<16x128xf32> to vector<16x128xbf16>
      %c0_18 = arith.constant 0 : index
      %c0_19 = arith.constant 0 : index
      %23 = vector.load %arg10[%c0_18, %c0_19] : memref<16x128xbf16, #tpu.memory_space<vmem>>, vector<16x128xbf16>
      tpu.vector_store %arg10[%c0_18, %c0_19], %22 {strides = array<i32>} : memref<16x128xbf16, #tpu.memory_space<vmem>>, vector<16x128xbf16>,
    } else {
    }
    %c0_i32_1 = arith.constant 0 : i32
    %3 = arith.cmpi slt, %arg2, %c0_i32_1 : i32
    %4 = arith.extui %3 : i1 to i32
    %c0_i32_2 = arith.constant 0 : i32
    %5 = arith.cmpi ne, %4, %c0_i32_2 : i32
    scf.if %5 {
      %c0 = arith.constant 0 : index
      %c0_7 = arith.constant 0 : index
      %12 = vector.load %arg10[%c0, %c0_7] : memref<16x128xbf16, #tpu.memory_space<vmem>>, vector<16x128xbf16>
      %c0_8 = arith.constant 0 : index
      %c0_9 = arith.constant 0 : index
      %c0_10 = arith.constant 0 : index
      %13 = vector.load %arg4[%c0_8, %c0_9, %c0_10] : memref<1x16x128xf32, #tpu.memory_space<vmem>>, vector<1x16x128xf32>
      %14 = vector.shape_cast %13 : vector<1x16x128xf32> to vector<16x128xf32>
      %15 = arith.truncf %14 : vector<16x128xf32> to vector<16x128xbf16>
      %c0_11 = arith.constant 0 : index
      %c0_12 = arith.constant 0 : index
      %c0_13 = arith.constant 0 : index
      %16 = vector.load %arg5[%c0_11, %c0_12, %c0_13] : memref<1x16x128xf32, #tpu.memory_space<vmem>>, vector<1x16x128xf32>
      %17 = vector.shape_cast %16 : vector<1x16x128xf32> to vector<16x128xf32>
      %18 = arith.truncf %17 : vector<16x128xf32> to vector<16x128xbf16>
      %cst = arith.constant dense<0.000000e+00> : vector<128x128xf32>
      %19 = tpu.matmul %15, %12, %cst {dimension_numbers = #tpu.dot_dimension_numbers<[0], [0], [1], [1], [0, 1, 1, 1], [], []>} : vector<16x128xbf16>, vector<16x128xbf16>, vector<128x128xf32> -> vector<128x128xf32>
      %c0_14 = arith.constant 0 : index
      %c0_15 = arith.constant 0 : index
      %20 = vector.load %arg7[%c0_14, %c0_15] : memref<1x128xf32, #tpu.memory_space<vmem>>, vector<1x128xf32>
      %cst_16 = arith.constant dense<0xFF800000> : vector<128xf32>
      %21 = vector.multi_reduction <maximumf>, %19, %cst_16 [0] : vector<128x128xf32> to vector<128xf32>
      %22 = vector.shape_cast %21 : vector<128xf32> to vector<1x128xf32>
      %23 = arith.maximumf %20, %22 : vector<1x128xf32>
      %24 = arith.subf %20, %23 : vector<1x128xf32>
      %25 = math.exp %24 : vector<1x128xf32>
      %26 = vector.broadcast %23 : vector<1x128xf32> to vector<128x128xf32>
      %27 = arith.subf %19, %26 : vector<128x128xf32>
      %28 = math.exp %27 : vector<128x128xf32>
      %c0_17 = arith.constant 0 : index
      %c0_18 = arith.constant 0 : index
      %29 = vector.load %arg8[%c0_17, %c0_18] : memref<1x128xf32, #tpu.memory_space<vmem>>, vector<1x128xf32>
      %30 = arith.mulf %25, %29 : vector<1x128xf32>
      %cst_19 = arith.constant dense<0.000000e+00> : vector<128xf32>
      %31 = vector.multi_reduction <add>, %28, %cst_19 [0] : vector<128x128xf32> to vector<128xf32>
      %32 = vector.shape_cast %31 : vector<128xf32> to vector<1x128xf32>
      %33 = arith.addf %30, %32 : vector<1x128xf32>
      %c0_20 = arith.constant 0 : index
      %c0_21 = arith.constant 0 : index
      %34 = vector.load %arg8[%c0_20, %c0_21] : memref<1x128xf32, #tpu.memory_space<vmem>>, vector<1x128xf32>
      tpu.vector_store %arg8[%c0_20, %c0_21], %33 {strides = array<i32>} : memref<1x128xf32, #tpu.memory_space<vmem>>, vector<1x128xf32>,
      %35 = arith.truncf %28 : vector<128x128xf32> to vector<128x128xbf16>
      %cst_22 = arith.constant dense<0.000000e+00> : vector<16x128xf32>
      %36 = tpu.matmul %18, %35, %cst_22 {dimension_numbers = #tpu.dot_dimension_numbers<[1], [0], [0], [1], [0, 0, 1, 1], [], []>} : vector<16x128xbf16>, vector<128x128xbf16>, vector<16x128xf32> -> vector<16x128xf32>
      %c0_23 = arith.constant 0 : index
      %c0_24 = arith.constant 0 : index
      %37 = vector.load %arg9[%c0_23, %c0_24] : memref<16x128xf32, #tpu.memory_space<vmem>>, vector<16x128xf32>
      %38 = vector.broadcast %25 : vector<1x128xf32> to vector<16x128xf32>
      %39 = arith.mulf %38, %37 : vector<16x128xf32>
      %40 = arith.addf %39, %36 : vector<16x128xf32>
      %c0_25 = arith.constant 0 : index
      %c0_26 = arith.constant 0 : index
      %41 = vector.load %arg9[%c0_25, %c0_26] : memref<16x128xf32, #tpu.memory_space<vmem>>, vector<16x128xf32>
      tpu.vector_store %arg9[%c0_25, %c0_26], %40 {strides = array<i32>} : memref<16x128xf32, #tpu.memory_space<vmem>>, vector<16x128xf32>,
      %c0_27 = arith.constant 0 : index
      %c0_28 = arith.constant 0 : index
      %42 = vector.load %arg7[%c0_27, %c0_28] : memref<1x128xf32, #tpu.memory_space<vmem>>, vector<1x128xf32>
      tpu.vector_store %arg7[%c0_27, %c0_28], %23 {strides = array<i32>} : memref<1x128xf32, #tpu.memory_space<vmem>>, vector<1x128xf32>,
    } else {
    }
    %c0_i32_3 = arith.constant 0 : i32
    %6 = arith.cmpi eq, %arg2, %c0_i32_3 : i32
    %7 = arith.extui %6 : i1 to i32
    %c0_i32_4 = arith.constant 0 : i32
    %8 = arith.cmpi ne, %7, %c0_i32_4 : i32
    scf.if %8 {
      %c0 = arith.constant 0 : index
      %c0_7 = arith.constant 0 : index
      %12 = vector.load %arg10[%c0, %c0_7] : memref<16x128xbf16, #tpu.memory_space<vmem>>, vector<16x128xbf16>
      %c0_8 = arith.constant 0 : index
      %c0_9 = arith.constant 0 : index
      %c0_10 = arith.constant 0 : index
      %13 = vector.load %arg4[%c0_8, %c0_9, %c0_10] : memref<1x16x128xf32, #tpu.memory_space<vmem>>, vector<1x16x128xf32>
      %14 = vector.shape_cast %13 : vector<1x16x128xf32> to vector<16x128xf32>
      %15 = arith.truncf %14 : vector<16x128xf32> to vector<16x128xbf16>
      %c0_11 = arith.constant 0 : index
      %c0_12 = arith.constant 0 : index
      %c0_13 = arith.constant 0 : index
      %16 = vector.load %arg5[%c0_11, %c0_12, %c0_13] : memref<1x16x128xf32, #tpu.memory_space<vmem>>, vector<1x16x128xf32>
      %17 = vector.shape_cast %16 : vector<1x16x128xf32> to vector<16x128xf32>
      %18 = arith.truncf %17 : vector<16x128xf32> to vector<16x128xbf16>
      %cst = arith.constant dense<0.000000e+00> : vector<128x128xf32>
      %19 = tpu.matmul %15, %12, %cst {dimension_numbers = #tpu.dot_dimension_numbers<[0], [0], [1], [1], [0, 1, 1, 1], [], []>} : vector<16x128xbf16>, vector<16x128xbf16>, vector<128x128xf32> -> vector<128x128xf32>
      %c128_i32 = arith.constant 128 : i32
      %20 = arith.muli %arg2, %c128_i32 : i32
      %21 = tpu.iota {dimensions = array<i32: 0>} : vector<128x128xi32>
      %22 = vector.broadcast %20 : i32 to vector<128x128xi32>
      %23 = arith.addi %22, %21 : vector<128x128xi32>
      %c16_i32 = arith.constant 16 : i32
      %24 = vector.broadcast %c16_i32 : i32 to vector<128x128xi32>
      %25 = arith.cmpi slt, %23, %24 : vector<128x128xi32>
      %cst_14 = arith.constant -1.000000e+30 : f32
      %26 = vector.broadcast %cst_14 : f32 to vector<128x128xf32>
      %27 = arith.select %25, %19, %26 : vector<128x128xi1>, vector<128x128xf32>
      %c0_15 = arith.constant 0 : index
      %c0_16 = arith.constant 0 : index
      %28 = vector.load %arg7[%c0_15, %c0_16] : memref<1x128xf32, #tpu.memory_space<vmem>>, vector<1x128xf32>
      %cst_17 = arith.constant dense<0xFF800000> : vector<128xf32>
      %29 = vector.multi_reduction <maximumf>, %27, %cst_17 [0] : vector<128x128xf32> to vector<128xf32>
      %30 = vector.shape_cast %29 : vector<128xf32> to vector<1x128xf32>
      %31 = arith.maximumf %28, %30 : vector<1x128xf32>
      %32 = arith.subf %28, %31 : vector<1x128xf32>
      %33 = math.exp %32 : vector<1x128xf32>
      %34 = vector.broadcast %31 : vector<1x128xf32> to vector<128x128xf32>
      %35 = arith.subf %27, %34 : vector<128x128xf32>
      %36 = math.exp %35 : vector<128x128xf32>
      %c0_18 = arith.constant 0 : index
      %c0_19 = arith.constant 0 : index
      %37 = vector.load %arg8[%c0_18, %c0_19] : memref<1x128xf32, #tpu.memory_space<vmem>>, vector<1x128xf32>
      %38 = arith.mulf %33, %37 : vector<1x128xf32>
      %cst_20 = arith.constant dense<0.000000e+00> : vector<128xf32>
      %39 = vector.multi_reduction <add>, %36, %cst_20 [0] : vector<128x128xf32> to vector<128xf32>
      %40 = vector.shape_cast %39 : vector<128xf32> to vector<1x128xf32>
      %41 = arith.addf %38, %40 : vector<1x128xf32>
      %c0_21 = arith.constant 0 : index
      %c0_22 = arith.constant 0 : index
      %42 = vector.load %arg8[%c0_21, %c0_22] : memref<1x128xf32, #tpu.memory_space<vmem>>, vector<1x128xf32>
      tpu.vector_store %arg8[%c0_21, %c0_22], %41 {strides = array<i32>} : memref<1x128xf32, #tpu.memory_space<vmem>>, vector<1x128xf32>,
      %43 = arith.truncf %36 : vector<128x128xf32> to vector<128x128xbf16>
      %cst_23 = arith.constant dense<0.000000e+00> : vector<16x128xf32>
      %44 = tpu.matmul %18, %43, %cst_23 {dimension_numbers = #tpu.dot_dimension_numbers<[1], [0], [0], [1], [0, 0, 1, 1], [], []>} : vector<16x128xbf16>, vector<128x128xbf16>, vector<16x128xf32> -> vector<16x128xf32>
      %c0_24 = arith.constant 0 : index
      %c0_25 = arith.constant 0 : index
      %45 = vector.load %arg9[%c0_24, %c0_25] : memref<16x128xf32, #tpu.memory_space<vmem>>, vector<16x128xf32>
      %46 = vector.broadcast %33 : vector<1x128xf32> to vector<16x128xf32>
      %47 = arith.mulf %46, %45 : vector<16x128xf32>
      %48 = arith.addf %47, %44 : vector<16x128xf32>
      %c0_26 = arith.constant 0 : index
      %c0_27 = arith.constant 0 : index
      %49 = vector.load %arg9[%c0_26, %c0_27] : memref<16x128xf32, #tpu.memory_space<vmem>>, vector<16x128xf32>
      tpu.vector_store %arg9[%c0_26, %c0_27], %48 {strides = array<i32>} : memref<16x128xf32, #tpu.memory_space<vmem>>, vector<16x128xf32>,
      %c0_28 = arith.constant 0 : index
      %c0_29 = arith.constant 0 : index
      %50 = vector.load %arg7[%c0_28, %c0_29] : memref<1x128xf32, #tpu.memory_space<vmem>>, vector<1x128xf32>
      tpu.vector_store %arg7[%c0_28, %c0_29], %31 {strides = array<i32>} : memref<1x128xf32, #tpu.memory_space<vmem>>, vector<1x128xf32>,
    } else {
    }
    %c0_i32_5 = arith.constant 0 : i32
    %9 = arith.cmpi eq, %arg2, %c0_i32_5 : i32
    %10 = arith.extui %9 : i1 to i32
    %c0_i32_6 = arith.constant 0 : i32
    %11 = arith.cmpi ne, %10, %c0_i32_6 : i32
    scf.if %11 {
      %c0 = arith.constant 0 : index
      %c0_7 = arith.constant 0 : index
      %12 = vector.load %arg8[%c0, %c0_7] : memref<1x128xf32, #tpu.memory_space<vmem>>, vector<1x128xf32>
      %13 = tpu.reciprocal %12 : vector<1x128xf32> -> vector<1x128xf32>
      %c0_8 = arith.constant 0 : index
      %c0_9 = arith.constant 0 : index
      %14 = vector.load %arg9[%c0_8, %c0_9] : memref<16x128xf32, #tpu.memory_space<vmem>>, vector<16x128xf32>
      %15 = vector.broadcast %13 : vector<1x128xf32> to vector<16x128xf32>
      %16 = arith.mulf %14, %15 : vector<16x128xf32>
      %c0_10 = arith.constant 0 : index
      %c0_11 = arith.constant 0 : index
      %c0_12 = arith.constant 0 : index
      %17 = vector.load %arg6[%c0_10, %c0_11, %c0_12] : memref<1x16x128xf32, #tpu.memory_space<vmem>>, vector<1x16x128xf32>
      %18 = vector.shape_cast %17 : vector<1x16x128xf32> to vector<16x128xf32>
      %19 = vector.shape_cast %16 : vector<16x128xf32> to vector<1x16x128xf32>
      tpu.vector_store %arg6[%c0_10, %c0_11, %c0_12], %19 {strides = array<i32>} : memref<1x16x128xf32, #tpu.memory_space<vmem>>, vector<1x16x128xf32>,
    } else {
    }
    return
  }
  func.func @transform_0(%arg0: i32, %arg1: i32, %arg2: i32) -> (i32, i32, i32) {
    %c0_i32 = arith.constant 0 : i32
    %c0_i32_0 = arith.constant 0 : i32
    return %arg0, %c0_i32, %arg1 : i32, i32, i32
  }
  func.func @transform_1(%arg0: i32, %arg1: i32, %arg2: i32) -> (i32, i32, i32) {
    %c1_i32 = arith.constant 1 : i32
    %c0_i32 = arith.constant 0 : i32
    return %arg0, %c1_i32, %arg2 : i32, i32, i32
  }
  func.func @transform_2(%arg0: i32, %arg1: i32, %arg2: i32) -> (i32, i32, i32) {
    %c2_i32 = arith.constant 2 : i32
    %c0_i32 = arith.constant 0 : i32
    return %arg0, %c2_i32, %arg2 : i32, i32, i32
  }
  func.func @transform_3(%arg0: i32, %arg1: i32, %arg2: i32) -> (i32, i32, i32) {
    %c0_i32 = arith.constant 0 : i32
    %c0_i32_0 = arith.constant 0 : i32
    return %arg0, %c0_i32, %arg1 : i32, i32, i32
  }
}

</mosaic_0001>

<llo_original>
// kernel: tpu_custom_call.1
$region0: #{tpu_custom_call.1}
  #allocation0 [shape = 'u32[]', space=smem, size = 0x4, offset = 0x4, fixed_abs, tag = 'smem constant byte address 0x4 - core index']
  #allocation1 [shape = 'u32[144,128]{1,0:T(1,128)}', space=vmem, size = 0x12000, scoped, tag = 'internal scratch']
  #allocation2 [shape = 'f32[1,128]{1,0:T(1,128)}', space=vmem, size = 0x200, scoped, tag = 'scratch operand']
  #allocation3 [shape = 'f32[1,128]{1,0:T(1,128)}', space=vmem, size = 0x200, scoped, tag = 'scratch operand']
  #allocation4 [shape = 'f32[16,128]{1,0:T(8,128)}', space=vmem, size = 0x2000, scoped, tag = 'scratch operand']
  #allocation5 [shape = 'bf16[16,128]{1,0:T(16,128)(2,1)}', space=vmem, size = 0x1000, scoped, tag = 'scratch operand']
  %s0 = inlined_call_operand.hbm [shape: f32[8,48,128], index: 0, kind: input, shape index: {}]
  %s1 = inlined_call_operand.hbm [shape: f32[8,48,128], index: 1, kind: input, shape index: {}]
  %s2 = inlined_call_operand.hbm [shape: f32[8,48,128], index: 2, kind: input, shape index: {}]
  %s3 = inlined_call_operand.hbm [shape: f32[8,16,128], index: 3, kind: output, shape index: {}]
  %s4 = sld [smem:[#allocation0]]
  $region69: #{tpu_custom_call.1} parent=0
    _
  %s6 = ssub.s32 1, %s4
  %s7 = scalar_select 0, %s6, %s4
  $region1: #{tpu_custom_call.1} parent=0
    #allocation6 [shape = 'u8[16384]{0}', space=vmem, size = 0x4000, scoped, tag = 'input window, operand 0']
    #allocation7 [shape = 's32[2]{0}', space=sflag, size = 0x8, scoped, tag = 'scoped memory for tpu_custom_call.1']
    #allocation8 [shape = 's32[2]{0}', space=sflag, size = 0x8, scoped, tag = 'scoped memory for tpu_custom_call.1']
    #allocation9 [shape = 'u8[16384]{0}', space=vmem, size = 0x4000, scoped, tag = 'input window, operand 1']
    #allocation10 [shape = 's32[2]{0}', space=sflag, size = 0x8, scoped, tag = 'scoped memory for tpu_custom_call.1']
    #allocation11 [shape = 'u8[16384]{0}', space=vmem, size = 0x4000, scoped, tag = 'input window, operand 2']
    #allocation12 [shape = 'u8[16384]{0}', space=vmem, size = 0x4000, scoped, tag = 'output window, operand 0']
    %8 = vsyncpa [#allocation7], 0
    %s9 = scalar_lea.sflag [#allocation7], 1
    %10 = vsyncpa %s9, 0
    %11 = vsyncpa [#allocation10], 0
    %s12 = scalar_lea.sflag [#allocation10], 1
    %13 = vsyncpa %s12, 0
    %14 = vsyncpa [#allocation8], 0
    %s15 = scalar_lea.sflag [#allocation8], 1
    %16 = vsyncpa %s15, 0
    loop: start=0, step=1, limit=10
    $region2: #{tpu_custom_call.1} parent=1 // loop_pre_header
      _
    $region3: #{tpu_custom_call.1} parent=1 // loop_header
      %s18 = sphi 0, %s22
      %p19 = scmp.ge.s32.totalorder %s18, 10
      %s25 = sphi 0, %s44
      %s26 = sphi 0, %s40
      %s27 = sphi 0, %s36
      %s28 = sphi 0, %s25
      %s29 = sphi 0, %s26
      %s30 = sphi 0, %s27
      %s31 = sphi 0, %s28
      %s32 = sphi 0, %s29
      %s33 = sphi 0, %s30
      %s49 = sphi 0, %s51
      %s52 = sphi 0, %s49
      %s53 = sphi 0, %s52
      %s69 = sphi 0, %s53
      %s77 = sphi 0, %s79
      %s80 = sphi 0, %s77
      %s81 = sphi 0, %s80
      %s97 = sphi 0, %s81
      %s105 = sphi 0, %s107
      %s108 = sphi 0, %s105
      %s109 = sphi 0, %s108
      %s125 = sphi 0, %s109
      %s133 = sphi 0, %s135
      %s136 = sphi 0, %s133
      %s137 = sphi 0, %s136
      %s153 = sphi 0, %s137
    $region4: #{tpu_custom_call.1} parent=1 // loop_header_branch
      %21 = sbr.rel (%p19) target = $region8
    $region5: #{tpu_custom_call.1} parent=1 // loop_body
      %s23 = ssub.s32 %s18, 1
      %s24 = ssub.s32 %s18, 2
      %s34 = sadd.s32 1, %s27
      %p35 = scmp.ge.s32.totalorder %s34, 1
      %s36 = scalar_select %p35, 0, %s34
      %s37 = sadd.s32 1, %s26
      %s38 = scalar_select %p35, %s37, %s26
      %p39 = scmp.ge.s32.totalorder %s38, 1
      %s40 = scalar_select %p39, 0, %s38
      %s41 = sadd.s32 1, %s25
      %s42 = scalar_select %p39, %s41, %s25
      %p43 = scmp.ge.s32.totalorder %s42, 8
      %s44 = scalar_select %p43, 0, %s42
      %s45 = ssub.s32 %s25, %s44
      %s46 = ssub.s32 %s26, %s40
      %s47 = sor.u32 %s45, %s46
      %p48 = scmp.eq.s32.totalorder %s47, 0
      %s50 = sadd.s32 %s49, 1
      %s51 = scalar_select %p48, %s49, %s50
      %p54 = pneg %p48
      %p55 = scmp.eq.s32.totalorder %s18, 7
      %p56 = por %p54, %p55
      %p57 = scmp.ne.s32.totalorder %s49, %s52
      %p58 = scmp.eq.s32.totalorder %s18, 0
      %p59 = por %p57, %p58
      %p60 = scmp.ne.s32.totalorder %s49, %s52
      %p61 = scmp.eq.s32.totalorder %s23, 7
      %p62 = por %p60, %p61
      %p63 = scmp.ne.s32.totalorder %s52, %s53
      %p64 = scmp.eq.s32.totalorder %s23, 0
      %p65 = por %p63, %p64
      %p66 = scmp.ne.s32.totalorder %s52, %s53
      %p67 = scmp.eq.s32.totalorder %s24, 7
      %p68 = por %p66, %p67
      %p70 = scmp.ne.s32.totalorder %s53, %s69
      %p71 = scmp.eq.s32.totalorder %s24, 0
      %p72 = por %p70, %p71
      %s73 = ssub.s32 %s25, %s44
      %s74 = ssub.s32 %s27, %s36
      %s75 = sor.u32 %s73, %s74
      %p76 = scmp.eq.s32.totalorder %s75, 0
      %s78 = sadd.s32 %s77, 1
      %s79 = scalar_select %p76, %s77, %s78
      %p82 = pneg %p76
      %p83 = scmp.eq.s32.totalorder %s18, 7
      %p84 = por %p82, %p83
      %p85 = scmp.ne.s32.totalorder %s77, %s80
      %p86 = scmp.eq.s32.totalorder %s18, 0
      %p87 = por %p85, %p86
      %p88 = scmp.ne.s32.totalorder %s77, %s80
      %p89 = scmp.eq.s32.totalorder %s23, 7
      %p90 = por %p88, %p89
      %p91 = scmp.ne.s32.totalorder %s80, %s81
      %p92 = scmp.eq.s32.totalorder %s23, 0
      %p93 = por %p91, %p92
      %p94 = scmp.ne.s32.totalorder %s80, %s81
      %p95 = scmp.eq.s32.totalorder %s24, 7
      %p96 = por %p94, %p95
      %p98 = scmp.ne.s32.totalorder %s81, %s97
      %p99 = scmp.eq.s32.totalorder %s24, 0
      %p100 = por %p98, %p99
      %s101 = ssub.s32 %s25, %s44
      %s102 = ssub.s32 %s27, %s36
      %s103 = sor.u32 %s101, %s102
      %p104 = scmp.eq.s32.totalorder %s103, 0
      %s106 = sadd.s32 %s105, 1
      %s107 = scalar_select %p104, %s105, %s106
      %p110 = pneg %p104
      %p111 = scmp.eq.s32.totalorder %s18, 7
      %p112 = por %p110, %p111
      %p113 = scmp.ne.s32.totalorder %s105, %s108
      %p114 = scmp.eq.s32.totalorder %s18, 0
      %p115 = por %p113, %p114
      %p116 = scmp.ne.s32.totalorder %s105, %s108
      %p117 = scmp.eq.s32.totalorder %s23, 7
      %p118 = por %p116, %p117
      %p119 = scmp.ne.s32.totalorder %s108, %s109
      %p120 = scmp.eq.s32.totalorder %s23, 0
      %p121 = por %p119, %p120
      %p122 = scmp.ne.s32.totalorder %s108, %s109
      %p123 = scmp.eq.s32.totalorder %s24, 7
      %p124 = por %p122, %p123
      %p126 = scmp.ne.s32.totalorder %s109, %s125
      %p127 = scmp.eq.s32.totalorder %s24, 0
      %p128 = por %p126, %p127
      %s129 = ssub.s32 %s25, %s44
      %s130 = ssub.s32 %s26, %s40
      %s131 = sor.u32 %s129, %s130
      %p132 = scmp.eq.s32.totalorder %s131, 0
      %s134 = sadd.s32 %s133, 1
      %s135 = scalar_select %p132, %s133, %s134
      %p138 = pneg %p132
      %p139 = scmp.eq.s32.totalorder %s18, 7
      %p140 = por %p138, %p139
      %p141 = scmp.ne.s32.totalorder %s133, %s136
      %p142 = scmp.eq.s32.totalorder %s18, 0
      %p143 = por %p141, %p142
      %p144 = scmp.ne.s32.totalorder %s133, %s136
      %p145 = scmp.eq.s32.totalorder %s23, 7
      %p146 = por %p144, %p145
      %p147 = scmp.ne.s32.totalorder %s136, %s137
      %p148 = scmp.eq.s32.totalorder %s23, 0
      %p149 = por %p147, %p148
      %p150 = scmp.ne.s32.totalorder %s136, %s137
      %p151 = scmp.eq.s32.totalorder %s24, 7
      %p152 = por %p150, %p151
      %p154 = scmp.ne.s32.totalorder %s137, %s153
      %p155 = scmp.eq.s32.totalorder %s24, 0
      %p156 = por %p154, %p155
      %p157 = scmp.le.s32.totalorder 1, %s18
      %p158 = scmp.lt.s32.totalorder %s18, 9
      %p159 = pnand %p157, %p158
      %p160 = pneg %p159
      // Predicated region
      $region9: #{tpu_custom_call.1} parent=5 // pred_check
        _
      $region10: #{tpu_custom_call.1} parent=5 // pred_check_branch
        %162 = sbr.rel (%p159) target = $region12
      $region11: #{tpu_custom_call.1} parent=5 // pred_region
        %s163 = ssub.s32 %s18, 1
      $region12: #{tpu_custom_call.1} parent=5 // pred_fallthru
        _
      %p164 = scmp.lt.s32.totalorder %s18, 8
      // Predicated region
      $region13: #{tpu_custom_call.1} parent=5 // pred_check
        %p165 = pneg %p164
      $region14: #{tpu_custom_call.1} parent=5 // pred_check_branch
        %167 = sbr.rel (%p165) target = $region16
      $region15: #{tpu_custom_call.1} parent=5 // pred_region
        // Predicated region
        $region17: #{tpu_custom_call.1} parent=15 // pred_check
          %p168 = pneg %p59
        $region18: #{tpu_custom_call.1} parent=15 // pred_check_branch
          %170 = sbr.rel (%p168) target = $region20
        $region19: #{tpu_custom_call.1} parent=15 // pred_region
          %s171 = sand.u32 %s49, 1
          %s172 = scalar_lea.sflag [#allocation7], %s171
          %s173 = sand.u32 %s49, 1
          %s174 = smul.addr %s173, 16
          %s175 = scalar_lea.vmem [#allocation6], %s174
          %s177 = ssub.s32 256, 256
          %178 = vsyncadd %s172, %s177
          %s179 = smul.addr %s25, 6
          %s180 = sadd.s32 %s26, %s179
          %s181 = smul.addr %s180, 128
          %s182 = scalar_lea.hbm %s0, %s181
          %s183 = sshll.u32 %s175, 4
          %s184 = int_to_ptr.vmem [resolvable:$true] %s183
          %189 = dma.hbm_to_vmem [thread:$0]  %s182, 256, %s184, %s172, 128, 128, 8
        $region20: #{tpu_custom_call.1} parent=15 // pred_fallthru
          _
        // Predicated region
        $region21: #{tpu_custom_call.1} parent=15 // pred_check
          %p190 = pneg %p87
        $region22: #{tpu_custom_call.1} parent=15 // pred_check_branch
          %192 = sbr.rel (%p190) target = $region24
        $region23: #{tpu_custom_call.1} parent=15 // pred_region
          %s193 = sand.u32 %s18, 1
          %s194 = scalar_lea.sflag [#allocation10], %s193
          %s195 = sand.u32 %s77, 1
          %s196 = smul.addr %s195, 16
          %s197 = scalar_lea.vmem [#allocation9], %s196
          %s199 = ssub.s32 256, 256
          %200 = vsyncadd %s194, %s199
          %s201 = sadd.s32 %s27, 2
          %s202 = smul.addr %s25, 6
          %s203 = sadd.s32 %s201, %s202
          %s204 = smul.addr %s203, 128
          %s205 = scalar_lea.hbm %s1, %s204
          %s206 = sshll.u32 %s197, 4
          %s207 = int_to_ptr.vmem [resolvable:$true] %s206
          %212 = dma.hbm_to_vmem [thread:$0]  %s205, 256, %s207, %s194, 128, 128, 8
        $region24: #{tpu_custom_call.1} parent=15 // pred_fallthru
          _
        // Predicated region
        $region25: #{tpu_custom_call.1} parent=15 // pred_check
          %p213 = pneg %p115
        $region26: #{tpu_custom_call.1} parent=15 // pred_check_branch
          %215 = sbr.rel (%p213) target = $region28
        $region27: #{tpu_custom_call.1} parent=15 // pred_region
          %s216 = sand.u32 %s18, 1
          %s217 = scalar_lea.sflag [#allocation10], %s216
          %s218 = sand.u32 %s105, 1
          %s219 = smul.addr %s218, 16
          %s220 = scalar_lea.vmem [#allocation11], %s219
          %s222 = ssub.s32 256, 256
          %223 = vsyncadd %s217, %s222
          %s224 = sadd.s32 %s27, 4
          %s225 = smul.addr %s25, 6
          %s226 = sadd.s32 %s224, %s225
          %s227 = smul.addr %s226, 128
          %s228 = scalar_lea.hbm %s2, %s227
          %s229 = sshll.u32 %s220, 4
          %s230 = int_to_ptr.vmem [resolvable:$true] %s229
          %235 = dma.hbm_to_vmem [thread:$0]  %s228, 256, %s230, %s217, 128, 128, 8
        $region28: #{tpu_custom_call.1} parent=15 // pred_fallthru
          _
      $region16: #{tpu_custom_call.1} parent=5 // pred_fallthru
        _
      %p236 = scmp.le.s32.totalorder 1, %s18
      %p237 = scmp.lt.s32.totalorder %s18, 9
      %p238 = pnand %p236, %p237
      %p239 = pneg %p238
      // Predicated region
      $region29: #{tpu_custom_call.1} parent=5 // pred_check
        _
      $region30: #{tpu_custom_call.1} parent=5 // pred_check_branch
        %241 = sbr.rel (%p238) target = $region32
      $region31: #{tpu_custom_call.1} parent=5 // pred_region
        %s242 = ssub.s32 %s18, 1
        %s243 = sand.u32 %s52, 1
        %s244 = scalar_lea.sflag [#allocation7], %s243
        %s245 = sand.u32 %s52, 1
        %s246 = smul.addr %s245, 16
        %s247 = scalar_lea.vmem [#allocation6], %s246
        // Predicated region
        $region33: #{tpu_custom_call.1} parent=31 // pred_check
          %p248 = pneg %p65
        $region34: #{tpu_custom_call.1} parent=31 // pred_check_branch
          %250 = sbr.rel (%p248) target = $region36
        $region35: #{tpu_custom_call.1} parent=31 // pred_region
          %251 = dma.done %s244, 256
        $region36: #{tpu_custom_call.1} parent=31 // pred_fallthru
          _
        %s252 = sand.u32 %s23, 1
        %s253 = scalar_lea.sflag [#allocation10], %s252
        %s254 = sand.u32 %s80, 1
        %s255 = smul.addr %s254, 16
        %s256 = scalar_lea.vmem [#allocation9], %s255
        // Predicated region
        $region37: #{tpu_custom_call.1} parent=31 // pred_check
          %p257 = pneg %p93
        $region38: #{tpu_custom_call.1} parent=31 // pred_check_branch
          %259 = sbr.rel (%p257) target = $region40
        $region39: #{tpu_custom_call.1} parent=31 // pred_region
          %260 = dma.done %s253, 256
        $region40: #{tpu_custom_call.1} parent=31 // pred_fallthru
          _
        %s261 = sand.u32 %s23, 1
        %s262 = scalar_lea.sflag [#allocation10], %s261
        %s263 = sand.u32 %s108, 1
        %s264 = smul.addr %s263, 16
        %s265 = scalar_lea.vmem [#allocation11], %s264
        // Predicated region
        $region41: #{tpu_custom_call.1} parent=31 // pred_check
          %p266 = pneg %p121
        $region42: #{tpu_custom_call.1} parent=31 // pred_check_branch
          %268 = sbr.rel (%p266) target = $region44
        $region43: #{tpu_custom_call.1} parent=31 // pred_region
          %269 = dma.done %s262, 256
        $region44: #{tpu_custom_call.1} parent=31 // pred_fallthru
          _
        %s270 = sand.u32 %s52, 1
        %s271 = scalar_lea.sflag [#allocation7], %s270
        %s272 = sand.u32 %s52, 1
        %s273 = smul.addr %s272, 16
        %s274 = scalar_lea.vmem [#allocation6], %s273
        %p275 = pneg %p65
        %p276 = pneg %p62
        %s277 = sand.u32 %s23, 1
        %s278 = scalar_lea.sflag [#allocation10], %s277
        %s279 = sand.u32 %s80, 1
        %s280 = smul.addr %s279, 16
        %s281 = scalar_lea.vmem [#allocation9], %s280
        %p282 = pneg %p93
        %p283 = pneg %p90
        %s284 = sand.u32 %s23, 1
        %s285 = scalar_lea.sflag [#allocation10], %s284
        %s286 = sand.u32 %s108, 1
        %s287 = smul.addr %s286, 16
        %s288 = scalar_lea.vmem [#allocation11], %s287
        %p289 = pneg %p121
        %p290 = pneg %p118
        %p291 = pneg %p149
        %p292 = pneg %p146
        %s293 = sand.u32 %s136, 1
        %s294 = scalar_lea.sflag [#allocation8], %s293
        %s295 = sand.u32 %s136, 1
        %s296 = smul.addr %s295, 16
        %s297 = scalar_lea.vmem [#allocation12], %s296
        %p299 = scmp.eq.s32.totalorder %s30, 0
        // Predicated region
        $region45: #{tpu_custom_call.1} parent=31 // pred_check
          %p300 = pneg %p299
        $region46: #{tpu_custom_call.1} parent=31 // pred_check_branch
          %302 = sbr.rel (%p300) target = $region48
        $region47: #{tpu_custom_call.1} parent=31 // pred_region
          %303 = vst [vmem:[#allocation2] sm:$0x1] -inf
          %304 = vst [vmem:[#allocation3] sm:$0x1] 0.0
          %305 = vst [vmem:[#allocation4] sm:$0xff] 0.0
          %306 = vst [vmem:[#allocation4 + $0x8] sm:$0xff] 0.0
          %v307 = vld [vmem:[%s247] sm:$0xff]
          %v308 = vld [vmem:[%s247 + $0x8] sm:$0xff]
          %v309 = vmul.f32 %v307, 0.35355338
          %v310 = vmul.f32 %v308, 0.35355338
          %v311 = vpack.c.bf16 %v310, %v309
          %312 = vst [vmem:[#allocation5] sm:$0xff] %v311
        $region48: #{tpu_custom_call.1} parent=31 // pred_fallthru
          _
        %p313 = scmp.lt.s32.totalorder %s30, 0
        // Predicated region
        $region49: #{tpu_custom_call.1} parent=31 // pred_check
          %p314 = pneg %p313
        $region50: #{tpu_custom_call.1} parent=31 // pred_check_branch
          %316 = sbr.rel (%p314) target = $region52
        $region51: #{tpu_custom_call.1} parent=31 // pred_region
          %v317 = vld [vmem:[#allocation5] sm:$0xff]
          %v318 = vld [vmem:[%s256] sm:$0xff]
          %v319 = vld [vmem:[%s256 + $0x8] sm:$0xff]
          %v320 = vpack.c.bf16 %v319, %v318
          %v321 = vld [vmem:[%s265] sm:$0xff]
          %v322 = vld [vmem:[%s265 + $0x8] sm:$0xff]
          %v323 = vpack.c.bf16 %v322, %v321
          %324 = vxpose.xlu0.c.b16.start [1/8] %v320, 128
          %325 = vxpose.xlu0.c.b16.cont [2/8] 0, 128
          %326 = vxpose.xlu0.c.b16.cont [3/8] 0, 128
          %327 = vxpose.xlu0.c.b16.cont [4/8] 0, 128
          %328 = vxpose.xlu0.c.b16.cont [5/8] 0, 128
          %329 = vxpose.xlu0.c.b16.cont [6/8] 0, 128
          %330 = vxpose.xlu0.c.b16.cont [7/8] 0, 128
          %331 = vxpose.xlu0.c.b16.end [8/8] 0, 128
          %v332 = vpop.trf.xlu0
          %v333 = vpop.trf.xlu0
          %v334 = vpop.trf.xlu0
          %v335 = vpop.trf.xlu0
          %v336 = vpop.trf.xlu0
          %v337 = vpop.trf.xlu0
          %v338 = vpop.trf.xlu0
          %v339 = vpop.trf.xlu0
          %vm340 = vcmask 130048
          %v342 = vsel %vm340, %v332, 0
          %v345 = vsel %vm340, %v333, 0
          %v348 = vsel %vm340, %v334, 0
          %v351 = vsel %vm340, %v335, 0
          %v354 = vsel %vm340, %v336, 0
          %v357 = vsel %vm340, %v337, 0
          %v360 = vsel %vm340, %v338, 0
          %v363 = vsel %vm340, %v339, 0
          %365 = vmatprep.subr.bf16.mxu0 0
          %366 = vmatpush1.bf16.msra.mxu0 %v317
          %367 = vmatprep.subr.bf16.mxu0 0
          %368 = vmatpush1.bf16.msra.mxu0 0
          %369 = vmatprep.subr.bf16.mxu0 0
          %370 = vmatpush1.bf16.msra.mxu0 0
          %371 = vmatprep.subr.bf16.mxu0 0
          %372 = vmatpush1.bf16.msra.mxu0 0
          %373 = vmatprep.subr.bf16.mxu0 0
          %374 = vmatpush1.bf16.msra.mxu0 0
          %375 = vmatprep.subr.bf16.mxu0 0
          %376 = vmatpush1.bf16.msra.mxu0 0
          %377 = vmatprep.subr.bf16.mxu0 0
          %378 = vmatpush1.bf16.msra.mxu0 0
          %379 = vmatprep.subr.bf16.mxu0 0
          %380 = vmatpush1.bf16.msra.mxu0 0
          %381 = vmatprep.subr.bf16.mxu0 0
          %382 = vmatpush1.bf16.msra.mxu0 0
          %383 = vmatprep.subr.bf16.mxu0 0
          %384 = vmatpush1.bf16.msra.mxu0 0
          %385 = vmatprep.subr.bf16.mxu0 0
          %386 = vmatpush1.bf16.msra.mxu0 0
          %387 = vmatprep.subr.bf16.mxu0 0
          %388 = vmatpush1.bf16.msra.mxu0 0
          %389 = vmatprep.subr.bf16.mxu0 0
          %390 = vmatpush1.bf16.msra.mxu0 0
          %391 = vmatprep.subr.bf16.mxu0 0
          %392 = vmatpush1.bf16.msra.mxu0 0
          %393 = vmatprep.subr.bf16.mxu0 0
          %394 = vmatpush1.bf16.msra.mxu0 0
          %395 = vmatprep.subr.bf16.mxu0 0
          %396 = vmatpush1.bf16.msra.mxu0 0
          %397 = vmatprep.mubr.bf16.mxu0 0
          %398 = vmatmul.mubr.bf16.gmra.mrb[0].mxu0 %v342
          %v399 = vpop.f32.mrb[0].mxu0
          %v400 = vadd.f32 0.0, %v399
          %v401 = vpop.f32.mrb[0].mxu0
          %v402 = vpop.f32.mrb[0].mxu0
          %v403 = vadd.f32 0.0, %v402
          %v404 = vpop.f32.mrb[0].mxu0
          %405 = vmatprep.mubr.bf16.mxu0 0
          %406 = vmatmul.mubr.bf16.gmra.mrb[0].mxu0 %v345
          %v407 = vpop.f32.mrb[0].mxu0
          %v408 = vadd.f32 0.0, %v407
          %v409 = vpop.f32.mrb[0].mxu0
          %v410 = vpop.f32.mrb[0].mxu0
          %v411 = vadd.f32 0.0, %v410
          %v412 = vpop.f32.mrb[0].mxu0
          %413 = vmatprep.mubr.bf16.mxu0 0
          %414 = vmatmul.mubr.bf16.gmra.mrb[0].mxu0 %v348
          %v415 = vpop.f32.mrb[0].mxu0
          %v416 = vadd.f32 0.0, %v415
          %v417 = vpop.f32.mrb[0].mxu0
          %v418 = vpop.f32.mrb[0].mxu0
          %v419 = vadd.f32 0.0, %v418
          %v420 = vpop.f32.mrb[0].mxu0
          %421 = vmatprep.mubr.bf16.mxu0 0
          %422 = vmatmul.mubr.bf16.gmra.mrb[0].mxu0 %v351
          %v423 = vpop.f32.mrb[0].mxu0
          %v424 = vadd.f32 0.0, %v423
          %v425 = vpop.f32.mrb[0].mxu0
          %v426 = vpop.f32.mrb[0].mxu0
          %v427 = vadd.f32 0.0, %v426
          %v428 = vpop.f32.mrb[0].mxu0
          %429 = vmatprep.mubr.bf16.mxu0 0
          %430 = vmatmul.mubr.bf16.gmra.mrb[0].mxu0 %v354
          %v431 = vpop.f32.mrb[0].mxu0
          %v432 = vadd.f32 0.0, %v431
          %v433 = vpop.f32.mrb[0].mxu0
          %v434 = vpop.f32.mrb[0].mxu0
          %v435 = vadd.f32 0.0, %v434
          %v436 = vpop.f32.mrb[0].mxu0
          %437 = vmatprep.mubr.bf16.mxu0 0
          %438 = vmatmul.mubr.bf16.gmra.mrb[0].mxu0 %v357
          %v439 = vpop.f32.mrb[0].mxu0
          %v440 = vadd.f32 0.0, %v439
          %v441 = vpop.f32.mrb[0].mxu0
          %v442 = vpop.f32.mrb[0].mxu0
          %v443 = vadd.f32 0.0, %v442
          %v444 = vpop.f32.mrb[0].mxu0
          %445 = vmatprep.mubr.bf16.mxu0 0
          %446 = vmatmul.mubr.bf16.gmra.mrb[0].mxu0 %v360
          %v447 = vpop.f32.mrb[0].mxu0
          %v448 = vadd.f32 0.0, %v447
          %v449 = vpop.f32.mrb[0].mxu0
          %v450 = vpop.f32.mrb[0].mxu0
          %v451 = vadd.f32 0.0, %v450
          %v452 = vpop.f32.mrb[0].mxu0
          %453 = vmatprep.mubr.bf16.mxu0 0
          %454 = vmatmul.mubr.bf16.gmra.mrb[0].mxu0 %v363
          %v455 = vpop.f32.mrb[0].mxu0
          %v456 = vadd.f32 0.0, %v455
          %v457 = vpop.f32.mrb[0].mxu0
          %v458 = vpop.f32.mrb[0].mxu0
          %v459 = vadd.f32 0.0, %v458
          %v460 = vpop.f32.mrb[0].mxu0
          %461 = vdwg.mxu0
          %v462 = vld [vmem:[#allocation2] sm:$0x1]
          %v463 = vmax.f32 %v400, %v416
          %v464 = vmax.f32 %v403, %v419
          %v465 = vmax.f32 %v408, %v424
          %v466 = vmax.f32 %v411, %v427
          %v467 = vmax.f32 %v463, %v432
          %v468 = vmax.f32 %v464, %v435
          %v469 = vmax.f32 %v465, %v440
          %v470 = vmax.f32 %v466, %v443
          %v471 = vmax.f32 %v467, %v448
          %v472 = vmax.f32 %v468, %v451
          %v473 = vmax.f32 %v469, %v456
          %v474 = vmax.f32 %v470, %v459
          %v475 = vmax.f32 %v471, %v472
          %v476 = vmax.f32 %v473, %v474
          %v477 = vmax.f32 %v475, %v476
          %v478 = vrot.slane %v477, 4
          %v479 = vmax.f32 %v477, %v478
          %v480 = vrot.slane %v479, 2
          %v481 = vmax.f32 %v479, %v480
          %v482 = vrot.slane %v481, 1
          %v483 = vmax.f32 %v481, %v482
          %v484 = vmax.f32 %v462, %v483
          %v485 = vsub.f32 %v462, %v484
          %v486 = vmul.f32 %v485, 1.442695
          %v487 = vpow.pop %v486
          %v489 = vlaneseq
          %v490 = vshrl.u32 %v489, 7
          %v491 = vsub.s32 0, %v490
          %v492 = vrot.slane %v484, %v491
          %v494 = vsub.f32 %v400, %v492
          %v495 = vsub.f32 %v403, %v492
          %v496 = vsub.f32 %v408, %v492
          %v497 = vsub.f32 %v411, %v492
          %v498 = vsub.f32 %v416, %v492
          %v499 = vsub.f32 %v419, %v492
          %v500 = vsub.f32 %v424, %v492
          %v501 = vsub.f32 %v427, %v492
          %v502 = vsub.f32 %v432, %v492
          %v503 = vsub.f32 %v435, %v492
          %v504 = vsub.f32 %v440, %v492
          %v505 = vsub.f32 %v443, %v492
          %v506 = vsub.f32 %v448, %v492
          %v507 = vsub.f32 %v451, %v492
          %v508 = vsub.f32 %v456, %v492
          %v509 = vsub.f32 %v459, %v492
          %v510 = vmul.f32 %v494, 1.442695
          %v511 = vpow.pop %v510
          %v512 = vmul.f32 %v495, 1.442695
          %v513 = vpow.pop %v512
          %v514 = vmul.f32 %v496, 1.442695
          %v515 = vpow.pop %v514
          %v516 = vmul.f32 %v497, 1.442695
          %v517 = vpow.pop %v516
          %v518 = vmul.f32 %v498, 1.442695
          %v519 = vpow.pop %v518
          %v520 = vmul.f32 %v499, 1.442695
          %v521 = vpow.pop %v520
          %v522 = vmul.f32 %v500, 1.442695
          %v523 = vpow.pop %v522
          %v524 = vmul.f32 %v501, 1.442695
          %v525 = vpow.pop %v524
          %v526 = vmul.f32 %v502, 1.442695
          %v527 = vpow.pop %v526
          %v528 = vmul.f32 %v503, 1.442695
          %v529 = vpow.pop %v528
          %v530 = vmul.f32 %v504, 1.442695
          %v531 = vpow.pop %v530
          %v532 = vmul.f32 %v505, 1.442695
          %v533 = vpow.pop %v532
          %v534 = vmul.f32 %v506, 1.442695
          %v535 = vpow.pop %v534
          %v536 = vmul.f32 %v507, 1.442695
          %v537 = vpow.pop %v536
          %v538 = vmul.f32 %v508, 1.442695
          %v539 = vpow.pop %v538
          %v540 = vmul.f32 %v509, 1.442695
          %v541 = vpow.pop %v540
          %v542 = vld [vmem:[#allocation3] sm:$0x1]
          %v543 = vmul.f32 %v487, %v542
          %v544 = vadd.f32 %v511, %v513
          %v545 = vadd.f32 %v544, %v515
          %v546 = vadd.f32 %v545, %v517
          %v547 = vadd.f32 %v546, %v519
          %v548 = vadd.f32 %v547, %v521
          %v549 = vadd.f32 %v548, %v523
          %v550 = vadd.f32 %v549, %v525
          %v551 = vadd.f32 %v550, %v527
          %v552 = vadd.f32 %v551, %v529
          %v553 = vadd.f32 %v552, %v531
          %v554 = vadd.f32 %v553, %v533
          %v555 = vadd.f32 %v554, %v535
          %v556 = vadd.f32 %v555, %v537
          %v557 = vadd.f32 %v556, %v539
          %v558 = vadd.f32 %v557, %v541
          %v559 = vrot.slane %v558, 4
          %v560 = vadd.f32 %v558, %v559
          %v561 = vrot.slane %v560, 2
          %v562 = vadd.f32 %v560, %v561
          %v563 = vrot.slane %v562, 1
          %v564 = vadd.f32 %v562, %v563
          %v565 = vadd.f32 %v543, %v564
          %566 = vst [vmem:[#allocation3] sm:$0x1] %v565
          %v567 = vpack.c.bf16 %v513, %v511
          %v568 = vpack.c.bf16 %v517, %v515
          %v569 = vpack.c.bf16 %v521, %v519
          %v570 = vpack.c.bf16 %v525, %v523
          %v571 = vpack.c.bf16 %v529, %v527
          %v572 = vpack.c.bf16 %v533, %v531
          %v573 = vpack.c.bf16 %v537, %v535
          %v574 = vpack.c.bf16 %v541, %v539
          %575 = vmatprep.subr.bf16.mxu0 0
          %576 = vmatpush1.bf16.msra.mxu0 %v567
          %577 = vmatprep.subr.bf16.mxu0 0
          %578 = vmatpush1.bf16.msra.mxu0 %v568
          %579 = vmatprep.subr.bf16.mxu0 0
          %580 = vmatpush1.bf16.msra.mxu0 %v569
          %581 = vmatprep.subr.bf16.mxu0 0
          %582 = vmatpush1.bf16.msra.mxu0 %v570
          %583 = vmatprep.subr.bf16.mxu0 0
          %584 = vmatpush1.bf16.msra.mxu0 %v571
          %585 = vmatprep.subr.bf16.mxu0 0
          %586 = vmatpush1.bf16.msra.mxu0 %v572
          %587 = vmatprep.subr.bf16.mxu0 0
          %588 = vmatpush1.bf16.msra.mxu0 %v573
          %589 = vmatprep.subr.bf16.mxu0 0
          %590 = vmatpush1.bf16.msra.mxu0 %v574
          %591 = vmatprep.subr.bf16.mxu0 0
          %592 = vmatpush1.bf16.msra.mxu0 0
          %593 = vmatprep.subr.bf16.mxu0 0
          %594 = vmatpush1.bf16.msra.mxu0 0
          %595 = vmatprep.subr.bf16.mxu0 0
          %596 = vmatpush1.bf16.msra.mxu0 0
          %597 = vmatprep.subr.bf16.mxu0 0
          %598 = vmatpush1.bf16.msra.mxu0 0
          %599 = vmatprep.subr.bf16.mxu0 0
          %600 = vmatpush1.bf16.msra.mxu0 0
          %601 = vmatprep.subr.bf16.mxu0 0
          %602 = vmatpush1.bf16.msra.mxu0 0
          %603 = vmatprep.subr.bf16.mxu0 0
          %604 = vmatpush1.bf16.msra.mxu0 0
          %605 = vmatprep.subr.bf16.mxu0 0
          %606 = vmatpush1.bf16.msra.mxu0 0
          %607 = vmatprep.mubr.bf16.mxu0 0
          %608 = vmatmul.mubr.bf16.gmra.mrb[0].mxu0 %v323
          %v609 = vpop.f32.mrb[0].mxu0
          %v610 = vadd.f32 0.0, %v609
          %v611 = vpop.f32.mrb[0].mxu0
          %v612 = vpop.f32.mrb[0].mxu0
          %v613 = vadd.f32 0.0, %v612
          %v614 = vpop.f32.mrb[0].mxu0
          %615 = vdwg.mxu0
          %v616 = vld [vmem:[#allocation4] sm:$0xff]
          %v617 = vld [vmem:[#allocation4 + $0x8] sm:$0xff]
          %v619 = vlaneseq
          %v620 = vshrl.u32 %v619, 7
          %v621 = vsub.s32 0, %v620
          %v622 = vrot.slane %v487, %v621
          %v624 = vmul.f32 %v622, %v616
          %v625 = vmul.f32 %v622, %v617
          %v626 = vadd.f32 %v624, %v610
          %v627 = vadd.f32 %v625, %v613
          %628 = vst [vmem:[#allocation4] sm:$0xff] %v626
          %629 = vst [vmem:[#allocation4 + $0x8] sm:$0xff] %v627
          %630 = vst [vmem:[#allocation2] sm:$0x1] %v484
        $region52: #{tpu_custom_call.1} parent=31 // pred_fallthru
          _
        // Predicated region
        $region53: #{tpu_custom_call.1} parent=31 // pred_check
          %p631 = pneg %p299
        $region54: #{tpu_custom_call.1} parent=31 // pred_check_branch
          %633 = sbr.rel (%p631) target = $region56
        $region55: #{tpu_custom_call.1} parent=31 // pred_region
          %v634 = vld [vmem:[#allocation5] sm:$0xff]
          %v635 = vld [vmem:[%s256] sm:$0xff]
          %v636 = vld [vmem:[%s256 + $0x8] sm:$0xff]
          %v637 = vpack.c.bf16 %v636, %v635
          %v638 = vld [vmem:[%s265] sm:$0xff]
          %v639 = vld [vmem:[%s265 + $0x8] sm:$0xff]
          %v640 = vpack.c.bf16 %v639, %v638
          %641 = vxpose.xlu0.c.b16.start [1/8] %v637, 128
          %642 = vxpose.xlu0.c.b16.cont [2/8] 0, 128
          %643 = vxpose.xlu0.c.b16.cont [3/8] 0, 128
          %644 = vxpose.xlu0.c.b16.cont [4/8] 0, 128
          %645 = vxpose.xlu0.c.b16.cont [5/8] 0, 128
          %646 = vxpose.xlu0.c.b16.cont [6/8] 0, 128
          %647 = vxpose.xlu0.c.b16.cont [7/8] 0, 128
          %648 = vxpose.xlu0.c.b16.end [8/8] 0, 128
          %v649 = vpop.trf.xlu0
          %v650 = vpop.trf.xlu0
          %v651 = vpop.trf.xlu0
          %v652 = vpop.trf.xlu0
          %v653 = vpop.trf.xlu0
          %v654 = vpop.trf.xlu0
          %v655 = vpop.trf.xlu0
          %v656 = vpop.trf.xlu0
          %vm657 = vcmask 130048
          %v659 = vsel %vm657, %v649, 0
          %v662 = vsel %vm657, %v650, 0
          %v665 = vsel %vm657, %v651, 0
          %v668 = vsel %vm657, %v652, 0
          %v671 = vsel %vm657, %v653, 0
          %v674 = vsel %vm657, %v654, 0
          %v677 = vsel %vm657, %v655, 0
          %v680 = vsel %vm657, %v656, 0
          %682 = vmatprep.subr.bf16.mxu0 0
          %683 = vmatpush1.bf16.msra.mxu0 %v634
          %684 = vmatprep.subr.bf16.mxu0 0
          %685 = vmatpush1.bf16.msra.mxu0 0
          %686 = vmatprep.subr.bf16.mxu0 0
          %687 = vmatpush1.bf16.msra.mxu0 0
          %688 = vmatprep.subr.bf16.mxu0 0
          %689 = vmatpush1.bf16.msra.mxu0 0
          %690 = vmatprep.subr.bf16.mxu0 0
          %691 = vmatpush1.bf16.msra.mxu0 0
          %692 = vmatprep.subr.bf16.mxu0 0
          %693 = vmatpush1.bf16.msra.mxu0 0
          %694 = vmatprep.subr.bf16.mxu0 0
          %695 = vmatpush1.bf16.msra.mxu0 0
          %696 = vmatprep.subr.bf16.mxu0 0
          %697 = vmatpush1.bf16.msra.mxu0 0
          %698 = vmatprep.subr.bf16.mxu0 0
          %699 = vmatpush1.bf16.msra.mxu0 0
          %700 = vmatprep.subr.bf16.mxu0 0
          %701 = vmatpush1.bf16.msra.mxu0 0
          %702 = vmatprep.subr.bf16.mxu0 0
          %703 = vmatpush1.bf16.msra.mxu0 0
          %704 = vmatprep.subr.bf16.mxu0 0
          %705 = vmatpush1.bf16.msra.mxu0 0
          %706 = vmatprep.subr.bf16.mxu0 0
          %707 = vmatpush1.bf16.msra.mxu0 0
          %708 = vmatprep.subr.bf16.mxu0 0
          %709 = vmatpush1.bf16.msra.mxu0 0
          %710 = vmatprep.subr.bf16.mxu0 0
          %711 = vmatpush1.bf16.msra.mxu0 0
          %712 = vmatprep.subr.bf16.mxu0 0
          %713 = vmatpush1.bf16.msra.mxu0 0
          %714 = vmatprep.mubr.bf16.mxu0 0
          %715 = vmatmul.mubr.bf16.gmra.mrb[0].mxu0 %v659
          %v716 = vpop.f32.mrb[0].mxu0
          %v717 = vadd.f32 0.0, %v716
          %v718 = vpop.f32.mrb[0].mxu0
          %v719 = vpop.f32.mrb[0].mxu0
          %v720 = vadd.f32 0.0, %v719
          %v721 = vpop.f32.mrb[0].mxu0
          %722 = vmatprep.mubr.bf16.mxu0 0
          %723 = vmatmul.mubr.bf16.gmra.mrb[0].mxu0 %v662
          %v724 = vpop.f32.mrb[0].mxu0
          %v725 = vadd.f32 0.0, %v724
          %v726 = vpop.f32.mrb[0].mxu0
          %v727 = vpop.f32.mrb[0].mxu0
          %v728 = vadd.f32 0.0, %v727
          %v729 = vpop.f32.mrb[0].mxu0
          %730 = vmatprep.mubr.bf16.mxu0 0
          %731 = vmatmul.mubr.bf16.gmra.mrb[0].mxu0 %v665
          %v732 = vpop.f32.mrb[0].mxu0
          %v733 = vadd.f32 0.0, %v732
          %v734 = vpop.f32.mrb[0].mxu0
          %v735 = vpop.f32.mrb[0].mxu0
          %v736 = vadd.f32 0.0, %v735
          %v737 = vpop.f32.mrb[0].mxu0
          %738 = vmatprep.mubr.bf16.mxu0 0
          %739 = vmatmul.mubr.bf16.gmra.mrb[0].mxu0 %v668
          %v740 = vpop.f32.mrb[0].mxu0
          %v741 = vadd.f32 0.0, %v740
          %v742 = vpop.f32.mrb[0].mxu0
          %v743 = vpop.f32.mrb[0].mxu0
          %v744 = vadd.f32 0.0, %v743
          %v745 = vpop.f32.mrb[0].mxu0
          %746 = vmatprep.mubr.bf16.mxu0 0
          %747 = vmatmul.mubr.bf16.gmra.mrb[0].mxu0 %v671
          %v748 = vpop.f32.mrb[0].mxu0
          %v749 = vadd.f32 0.0, %v748
          %v750 = vpop.f32.mrb[0].mxu0
          %v751 = vpop.f32.mrb[0].mxu0
          %v752 = vadd.f32 0.0, %v751
          %v753 = vpop.f32.mrb[0].mxu0
          %754 = vmatprep.mubr.bf16.mxu0 0
          %755 = vmatmul.mubr.bf16.gmra.mrb[0].mxu0 %v674
          %v756 = vpop.f32.mrb[0].mxu0
          %v757 = vadd.f32 0.0, %v756
          %v758 = vpop.f32.mrb[0].mxu0
          %v759 = vpop.f32.mrb[0].mxu0
          %v760 = vadd.f32 0.0, %v759
          %v761 = vpop.f32.mrb[0].mxu0
          %762 = vmatprep.mubr.bf16.mxu0 0
          %763 = vmatmul.mubr.bf16.gmra.mrb[0].mxu0 %v677
          %v764 = vpop.f32.mrb[0].mxu0
          %v765 = vadd.f32 0.0, %v764
          %v766 = vpop.f32.mrb[0].mxu0
          %v767 = vpop.f32.mrb[0].mxu0
          %v768 = vadd.f32 0.0, %v767
          %v769 = vpop.f32.mrb[0].mxu0
          %770 = vmatprep.mubr.bf16.mxu0 0
          %771 = vmatmul.mubr.bf16.gmra.mrb[0].mxu0 %v680
          %v772 = vpop.f32.mrb[0].mxu0
          %v773 = vadd.f32 0.0, %v772
          %v774 = vpop.f32.mrb[0].mxu0
          %v775 = vpop.f32.mrb[0].mxu0
          %v776 = vadd.f32 0.0, %v775
          %v777 = vpop.f32.mrb[0].mxu0
          %778 = vdwg.mxu0
          %s779 = smul.u32 %s30, 128
          %v780 = vlaneseq
          %v781 = vshrl.u32 %v780, 7
          %v782 = vadd.s32 %v781, 8
          %v783 = vadd.s32 %v781, 16
          %v784 = vadd.s32 %v781, 24
          %v785 = vadd.s32 %v781, 32
          %v786 = vadd.s32 %v781, 40
          %v787 = vadd.s32 %v781, 48
          %v788 = vadd.s32 %v781, 56
          %v789 = vadd.s32 %v781, 64
          %v790 = vadd.s32 %v781, 72
          %v791 = vadd.s32 %v781, 80
          %v792 = vadd.s32 %v781, 88
          %v793 = vadd.s32 %v781, 96
          %v794 = vadd.s32 %v781, 104
          %v795 = vadd.s32 %v781, 112
          %v796 = vadd.s32 %v781, 120
          %v797 = vstv %s779
          %v798 = vadd.s32 %v797, %v781
          %v799 = vadd.s32 %v797, %v782
          %v800 = vadd.s32 %v797, %v783
          %v801 = vadd.s32 %v797, %v784
          %v802 = vadd.s32 %v797, %v785
          %v803 = vadd.s32 %v797, %v786
          %v804 = vadd.s32 %v797, %v787
          %v805 = vadd.s32 %v797, %v788
          %v806 = vadd.s32 %v797, %v789
          %v807 = vadd.s32 %v797, %v790
          %v808 = vadd.s32 %v797, %v791
          %v809 = vadd.s32 %v797, %v792
          %v810 = vadd.s32 %v797, %v793
          %v811 = vadd.s32 %v797, %v794
          %v812 = vadd.s32 %v797, %v795
          %v813 = vadd.s32 %v797, %v796
          %vm814 = vcmp.lt.s32.totalorder %v798, 16
          %vm815 = vcmp.lt.s32.totalorder %v799, 16
          %vm816 = vcmp.lt.s32.totalorder %v800, 16
          %vm817 = vcmp.lt.s32.totalorder %v801, 16
          %vm818 = vcmp.lt.s32.totalorder %v802, 16
          %vm819 = vcmp.lt.s32.totalorder %v803, 16
          %vm820 = vcmp.lt.s32.totalorder %v804, 16
          %vm821 = vcmp.lt.s32.totalorder %v805, 16
          %vm822 = vcmp.lt.s32.totalorder %v806, 16
          %vm823 = vcmp.lt.s32.totalorder %v807, 16
          %vm824 = vcmp.lt.s32.totalorder %v808, 16
          %vm825 = vcmp.lt.s32.totalorder %v809, 16
          %vm826 = vcmp.lt.s32.totalorder %v810, 16
          %vm827 = vcmp.lt.s32.totalorder %v811, 16
          %vm828 = vcmp.lt.s32.totalorder %v812, 16
          %vm829 = vcmp.lt.s32.totalorder %v813, 16
          %v830 = vsel %vm814, %v717, -1e+30
          %v831 = vsel %vm815, %v720, -1e+30
          %v832 = vsel %vm816, %v725, -1e+30
          %v833 = vsel %vm817, %v728, -1e+30
          %v834 = vsel %vm818, %v733, -1e+30
          %v835 = vsel %vm819, %v736, -1e+30
          %v836 = vsel %vm820, %v741, -1e+30
          %v837 = vsel %vm821, %v744, -1e+30
          %v838 = vsel %vm822, %v749, -1e+30
          %v839 = vsel %vm823, %v752, -1e+30
          %v840 = vsel %vm824, %v757, -1e+30
          %v841 = vsel %vm825, %v760, -1e+30
          %v842 = vsel %vm826, %v765, -1e+30
          %v843 = vsel %vm827, %v768, -1e+30
          %v844 = vsel %vm828, %v773, -1e+30
          %v845 = vsel %vm829, %v776, -1e+30
          %v846 = vld [vmem:[#allocation2] sm:$0x1]
          %v847 = vmax.f32 %v830, %v834
          %v848 = vmax.f32 %v831, %v835
          %v849 = vmax.f32 %v832, %v836
          %v850 = vmax.f32 %v833, %v837
          %v851 = vmax.f32 %v847, %v838
          %v852 = vmax.f32 %v848, %v839
          %v853 = vmax.f32 %v849, %v840
          %v854 = vmax.f32 %v850, %v841
          %v855 = vmax.f32 %v851, %v842
          %v856 = vmax.f32 %v852, %v843
          %v857 = vmax.f32 %v853, %v844
          %v858 = vmax.f32 %v854, %v845
          %v859 = vmax.f32 %v855, %v856
          %v860 = vmax.f32 %v857, %v858
          %v861 = vmax.f32 %v859, %v860
          %v862 = vrot.slane %v861, 4
          %v863 = vmax.f32 %v861, %v862
          %v864 = vrot.slane %v863, 2
          %v865 = vmax.f32 %v863, %v864
          %v866 = vrot.slane %v865, 1
          %v867 = vmax.f32 %v865, %v866
          %v868 = vmax.f32 %v846, %v867
          %v869 = vsub.f32 %v846, %v868
          %v870 = vmul.f32 %v869, 1.442695
          %v871 = vpow.pop %v870
          %v873 = vlaneseq
          %v874 = vshrl.u32 %v873, 7
          %v875 = vsub.s32 0, %v874
          %v876 = vrot.slane %v868, %v875
          %v878 = vsub.f32 %v830, %v876
          %v879 = vsub.f32 %v831, %v876
          %v880 = vsub.f32 %v832, %v876
          %v881 = vsub.f32 %v833, %v876
          %v882 = vsub.f32 %v834, %v876
          %v883 = vsub.f32 %v835, %v876
          %v884 = vsub.f32 %v836, %v876
          %v885 = vsub.f32 %v837, %v876
          %v886 = vsub.f32 %v838, %v876
          %v887 = vsub.f32 %v839, %v876
          %v888 = vsub.f32 %v840, %v876
          %v889 = vsub.f32 %v841, %v876
          %v890 = vsub.f32 %v842, %v876
          %v891 = vsub.f32 %v843, %v876
          %v892 = vsub.f32 %v844, %v876
          %v893 = vsub.f32 %v845, %v876
          %v894 = vmul.f32 %v878, 1.442695
          %v895 = vpow.pop %v894
          %v896 = vmul.f32 %v879, 1.442695
          %v897 = vpow.pop %v896
          %v898 = vmul.f32 %v880, 1.442695
          %v899 = vpow.pop %v898
          %v900 = vmul.f32 %v881, 1.442695
          %v901 = vpow.pop %v900
          %v902 = vmul.f32 %v882, 1.442695
          %v903 = vpow.pop %v902
          %v904 = vmul.f32 %v883, 1.442695
          %v905 = vpow.pop %v904
          %v906 = vmul.f32 %v884, 1.442695
          %v907 = vpow.pop %v906
          %v908 = vmul.f32 %v885, 1.442695
          %v909 = vpow.pop %v908
          %v910 = vmul.f32 %v886, 1.442695
          %v911 = vpow.pop %v910
          %v912 = vmul.f32 %v887, 1.442695
          %v913 = vpow.pop %v912
          %v914 = vmul.f32 %v888, 1.442695
          %v915 = vpow.pop %v914
          %v916 = vmul.f32 %v889, 1.442695
          %v917 = vpow.pop %v916
          %v918 = vmul.f32 %v890, 1.442695
          %v919 = vpow.pop %v918
          %v920 = vmul.f32 %v891, 1.442695
          %v921 = vpow.pop %v920
          %v922 = vmul.f32 %v892, 1.442695
          %v923 = vpow.pop %v922
          %v924 = vmul.f32 %v893, 1.442695
          %v925 = vpow.pop %v924
          %v926 = vld [vmem:[#allocation3] sm:$0x1]
          %v927 = vmul.f32 %v871, %v926
          %v928 = vadd.f32 %v895, %v897
          %v929 = vadd.f32 %v928, %v899
          %v930 = vadd.f32 %v929, %v901
          %v931 = vadd.f32 %v930, %v903
          %v932 = vadd.f32 %v931, %v905
          %v933 = vadd.f32 %v932, %v907
          %v934 = vadd.f32 %v933, %v909
          %v935 = vadd.f32 %v934, %v911
          %v936 = vadd.f32 %v935, %v913
          %v937 = vadd.f32 %v936, %v915
          %v938 = vadd.f32 %v937, %v917
          %v939 = vadd.f32 %v938, %v919
          %v940 = vadd.f32 %v939, %v921
          %v941 = vadd.f32 %v940, %v923
          %v942 = vadd.f32 %v941, %v925
          %v943 = vrot.slane %v942, 4
          %v944 = vadd.f32 %v942, %v943
          %v945 = vrot.slane %v944, 2
          %v946 = vadd.f32 %v944, %v945
          %v947 = vrot.slane %v946, 1
          %v948 = vadd.f32 %v946, %v947
          %v949 = vadd.f32 %v927, %v948
          %950 = vst [vmem:[#allocation3] sm:$0x1] %v949
          %v951 = vpack.c.bf16 %v897, %v895
          %v952 = vpack.c.bf16 %v901, %v899
          %v953 = vpack.c.bf16 %v905, %v903
          %v954 = vpack.c.bf16 %v909, %v907
          %v955 = vpack.c.bf16 %v913, %v911
          %v956 = vpack.c.bf16 %v917, %v915
          %v957 = vpack.c.bf16 %v921, %v919
          %v958 = vpack.c.bf16 %v925, %v923
          %959 = vmatprep.subr.bf16.mxu0 0
          %960 = vmatpush1.bf16.msra.mxu0 %v951
          %961 = vmatprep.subr.bf16.mxu0 0
          %962 = vmatpush1.bf16.msra.mxu0 %v952
          %963 = vmatprep.subr.bf16.mxu0 0
          %964 = vmatpush1.bf16.msra.mxu0 %v953
          %965 = vmatprep.subr.bf16.mxu0 0
          %966 = vmatpush1.bf16.msra.mxu0 %v954
          %967 = vmatprep.subr.bf16.mxu0 0
          %968 = vmatpush1.bf16.msra.mxu0 %v955
          %969 = vmatprep.subr.bf16.mxu0 0
          %970 = vmatpush1.bf16.msra.mxu0 %v956
          %971 = vmatprep.subr.bf16.mxu0 0
          %972 = vmatpush1.bf16.msra.mxu0 %v957
          %973 = vmatprep.subr.bf16.mxu0 0
          %974 = vmatpush1.bf16.msra.mxu0 %v958
          %975 = vmatprep.subr.bf16.mxu0 0
          %976 = vmatpush1.bf16.msra.mxu0 0
          %977 = vmatprep.subr.bf16.mxu0 0
          %978 = vmatpush1.bf16.msra.mxu0 0
          %979 = vmatprep.subr.bf16.mxu0 0
          %980 = vmatpush1.bf16.msra.mxu0 0
          %981 = vmatprep.subr.bf16.mxu0 0
          %982 = vmatpush1.bf16.msra.mxu0 0
          %983 = vmatprep.subr.bf16.mxu0 0
          %984 = vmatpush1.bf16.msra.mxu0 0
          %985 = vmatprep.subr.bf16.mxu0 0
          %986 = vmatpush1.bf16.msra.mxu0 0
          %987 = vmatprep.subr.bf16.mxu0 0
          %988 = vmatpush1.bf16.msra.mxu0 0
          %989 = vmatprep.subr.bf16.mxu0 0
          %990 = vmatpush1.bf16.msra.mxu0 0
          %991 = vmatprep.mubr.bf16.mxu0 0
          %992 = vmatmul.mubr.bf16.gmra.mrb[0].mxu0 %v640
          %v993 = vpop.f32.mrb[0].mxu0
          %v994 = vadd.f32 0.0, %v993
          %v995 = vpop.f32.mrb[0].mxu0
          %v996 = vpop.f32.mrb[0].mxu0
          %v997 = vadd.f32 0.0, %v996
          %v998 = vpop.f32.mrb[0].mxu0
          %999 = vdwg.mxu0
          %v1000 = vld [vmem:[#allocation4] sm:$0xff]
          %v1001 = vld [vmem:[#allocation4 + $0x8] sm:$0xff]
          %v1003 = vlaneseq
          %v1004 = vshrl.u32 %v1003, 7
          %v1005 = vsub.s32 0, %v1004
          %v1006 = vrot.slane %v871, %v1005
          %v1008 = vmul.f32 %v1006, %v1000
          %v1009 = vmul.f32 %v1006, %v1001
          %v1010 = vadd.f32 %v1008, %v994
          %v1011 = vadd.f32 %v1009, %v997
          %1012 = vst [vmem:[#allocation4] sm:$0xff] %v1010
          %1013 = vst [vmem:[#allocation4 + $0x8] sm:$0xff] %v1011
          %1014 = vst [vmem:[#allocation2] sm:$0x1] %v868
          %v1015 = vld [vmem:[#allocation3] sm:$0x1]
          %v1016 = vrcp.pop %v1015
          %v1017 = vld [vmem:[#allocation4] sm:$0xff]
          %v1018 = vld [vmem:[#allocation4 + $0x8] sm:$0xff]
          %v1020 = vlaneseq
          %v1021 = vshrl.u32 %v1020, 7
          %v1022 = vsub.s32 0, %v1021
          %v1023 = vrot.slane %v1016, %v1022
          %v1025 = vmul.f32 %v1017, %v1023
          %v1026 = vmul.f32 %v1018, %v1023
          %1027 = vst [vmem:[%s297] sm:$0xff] %v1025
          %1028 = vst [vmem:[%s297 + $0x8] sm:$0xff] %v1026
        $region56: #{tpu_custom_call.1} parent=31 // pred_fallthru
          _
        %s1029 = sand.u32 %s136, 1
        %s1030 = scalar_lea.sflag [#allocation8], %s1029
        %s1031 = sand.u32 %s136, 1
        %s1032 = smul.addr %s1031, 16
        %s1033 = scalar_lea.vmem [#allocation12], %s1032
        // Predicated region
        $region57: #{tpu_custom_call.1} parent=31 // pred_check
          %p1034 = pneg %p146
        $region58: #{tpu_custom_call.1} parent=31 // pred_check_branch
          %1036 = sbr.rel (%p1034) target = $region60
        $region59: #{tpu_custom_call.1} parent=31 // pred_region
          %s1038 = ssub.s32 256, 256
          %1039 = vsyncadd %s1030, %s1038
          %s1040 = smul.addr %s28, 2
          %s1041 = sadd.s32 %s29, %s1040
          %s1042 = smul.addr %s1041, 128
          %s1043 = scalar_lea.hbm %s3, %s1042
          %s1044 = sshll.u32 %s1033, 4
          %s1045 = int_to_ptr.vmem [resolvable:$true] %s1044
          %1050 = dma.vmem_to_hbm [thread:$0]  %s1045, 256, %s1043, %s1030, 128, 128, 8
        $region60: #{tpu_custom_call.1} parent=31 // pred_fallthru
          _
      $region32: #{tpu_custom_call.1} parent=5 // pred_fallthru
        _
      %p1051 = scmp.le.s32.totalorder 2, %s18
      // Predicated region
      $region61: #{tpu_custom_call.1} parent=5 // pred_check
        %p1052 = pneg %p1051
      $region62: #{tpu_custom_call.1} parent=5 // pred_check_branch
        %1054 = sbr.rel (%p1052) target = $region64
      $region63: #{tpu_custom_call.1} parent=5 // pred_region
        %s1055 = ssub.s32 %s18, 2
        // Predicated region
        $region65: #{tpu_custom_call.1} parent=63 // pred_check
          %p1056 = pneg %p152
        $region66: #{tpu_custom_call.1} parent=63 // pred_check_branch
          %1058 = sbr.rel (%p1056) target = $region68
        $region67: #{tpu_custom_call.1} parent=63 // pred_region
          %s1059 = sand.u32 %s137, 1
          %s1060 = scalar_lea.sflag [#allocation8], %s1059
          %s1061 = sand.u32 %s137, 1
          %s1062 = smul.addr %s1061, 16
          %s1063 = scalar_lea.vmem [#allocation12], %s1062
          %1064 = dma.done %s1060, 256
        $region68: #{tpu_custom_call.1} parent=63 // pred_fallthru
          _
      $region64: #{tpu_custom_call.1} parent=5 // pred_fallthru
        _
    $region6: #{tpu_custom_call.1} parent=1 // loop_footer
      %s22 = sadd.s32 1, %s18
    $region7: #{tpu_custom_call.1} parent=1 // loop_footer_branch
      %17 = sbr.rel target = $region3
    $region8: #{tpu_custom_call.1} parent=1 // loop_exit
      _
    %1065 = vsyncpa [#allocation7], 1
    %s1066 = scalar_lea.sflag [#allocation7], 1
    %1067 = vsyncpa %s1066, 1
    %1068 = vsyncpa [#allocation10], 1
    %s1069 = scalar_lea.sflag [#allocation10], 1
    %1070 = vsyncpa %s1069, 1
    %1071 = vsyncpa [#allocation8], 1
    %s1072 = scalar_lea.sflag [#allocation8], 1
    %1073 = vsyncpa %s1072, 1

</llo_original>
